<compile_context>
chip_gen: v5e
topology: v5e:2x2
jax: 0.10.0
libtpu: 0.0.40
codegen_flags: <defaults>
</compile_context>

<pallas_src>
import jax
import jax.numpy as jnp
from jax.experimental import pallas as pl
from jax.experimental.pallas import tpu as pltpu


def _round_up(x, m):
    return ((x + m - 1) // m) * m


def mlp_kernel(xt_ref, w1_ref, b1_ref, w2_ref, b2_ref, out_ref):
    xt = xt_ref[...]            # (D_in_pad, TILE_B) bf16, batch on lanes
    w1 = w1_ref[...]            # (H_pad, D_in_pad)  bf16, resident weights
    b1 = b1_ref[...]            # (H_pad, 1) f32
    w2 = w2_ref[...]            # (H_pad, 1) f32
    b2 = b2_ref[0, 0]           # scalar (SMEM)

    # fc1: (H_pad, K) @ (K, TILE_B) MXU matmul, bf16 inputs, f32 accumulation,
    # no in-kernel transpose/relayout.
    h = jax.lax.dot_general(
        w1, xt,
        dimension_numbers=(((1,), (0,)), ((), ())),
        preferred_element_type=jnp.float32,
    )
    h = jnp.maximum(h + b1, 0.0)                        # bias + relu (VPU, f32)

    # fc2: single output unit -> VPU multiply + XLU sublane reduce (overlaps
    # with MXU / DMA; MXU has slack since the kernel is mem-bound).
    logits = jnp.sum(h * w2, axis=0, keepdims=True) + b2      # (1, TILE_B)
    out_ref[...] = jax.nn.sigmoid(logits).astype(out_ref.dtype)


def mlp_forward(x, w1, b1, w2, b2, *, tile_b=512):
    """sigmoid(relu(x @ W1.T + b1) @ W2.T + b2) with PyTorch Linear weights.

    x : (B, D_in) f32;  w1: (H, D_in);  b1: (H,);  w2: (1, H);  b2: (1,)
    returns (B, 1) f32.
    """
    B, d_in = x.shape
    H = w1.shape[0]

    d_in_pad = _round_up(d_in, 8)          # sublane alignment for x_T / W1 cols
    h_pad = _round_up(H, 8)                # sublane alignment for h / W1 rows
    b_pad = _round_up(B, tile_b)           # lane-dense batch tiles
    num_tiles = b_pad // tile_b

    f32, bf16 = jnp.float32, jnp.bfloat16

    # --- layout plumbing stays in the wrapper ---------------------------------
    # x: bf16 cast + batch-on-lanes transpose; skip the padded copy (an extra
    # HBM pass over x) whenever the shapes already line up.
    x_bf = x.astype(bf16)
    if d_in == d_in_pad and B == b_pad:
        xt = x_bf.T
    else:
        xt = jnp.zeros((d_in_pad, b_pad), bf16).at[:d_in, :B].set(x_bf.T)

    w1_bf = w1.astype(bf16)
    if H == h_pad and d_in == d_in_pad:
        w1p = w1_bf
    else:
        w1p = jnp.zeros((h_pad, d_in_pad), bf16).at[:H, :d_in].set(w1_bf)

    b1p = jnp.zeros((h_pad, 1), f32).at[:H, 0].set(jnp.reshape(b1, (-1,)).astype(f32))
    w2p = jnp.zeros((h_pad, 1), f32).at[:H, 0].set(jnp.reshape(w2, (-1,)).astype(f32))
    b2p = jnp.reshape(jnp.asarray(b2, f32), (1, 1))

    # Advisory cost estimate so XLA schedules neighbors around the custom call.
    cost = pl.CostEstimate(
        flops=2 * H * d_in * B + 2 * H * B,
        transcendentals=B,                                   # sigmoid exp
        bytes_accessed=xt.size * 2 + w1p.size * 2
        + (b1p.size + w2p.size) * 4 + b_pad * 4,
    )

    # VMEM budget: double-buffered x/out tiles + resident weights + fc1
    # activation.  Clamp to 48 MiB so large-d_in configs stay inside v7x's
    # 64 MiB physical VMEM; floor at the 32 MiB scoped default.
    vmem_budget = (2 * d_in_pad * tile_b * 2        # x tiles (bf16, 2 buffers)
                   + 2 * tile_b * 4                 # out tiles (f32, 2 buffers)
                   + 2 * h_pad * d_in_pad * 2       # W1 (bf16)
                   + 4 * h_pad * 4                  # b1, w2
                   + 2 * h_pad * tile_b * 4)        # fc1 activation + slack
    vmem_limit = min(max(2 * vmem_budget, 32 << 20), 48 << 20)

    out_row = pl.pallas_call(
        mlp_kernel,
        out_shape=jax.ShapeDtypeStruct((1, b_pad), f32),
        grid=(num_tiles,),
        in_specs=[
            pl.BlockSpec((d_in_pad, tile_b), lambda i: (0, i)),   # x tile / step
            pl.BlockSpec((h_pad, d_in_pad), lambda i: (0, 0)),    # W1 resident
            pl.BlockSpec((h_pad, 1), lambda i: (0, 0)),           # b1 resident
            pl.BlockSpec((h_pad, 1), lambda i: (0, 0)),           # w2 resident
            pl.BlockSpec(memory_space=pltpu.MemorySpace.SMEM),    # b2 scalar
        ],
        out_specs=pl.BlockSpec((1, tile_b), lambda i: (0, i)),    # lane-dense row
        compiler_params=pltpu.CompilerParams(
            dimension_semantics=("parallel",),
            vmem_limit_bytes=vmem_limit,
        ),
        cost_estimate=cost,
    )(xt, w1p, b1p, w2p, b2p)

    # Un-pad / un-transpose back to the PyTorch (B, 1) output shape.
    return out_row[0, :B].reshape(B, 1)


if __name__ == "__main__":
    key = jax.random.PRNGKey(0)
    kx, k1, k2, k3, k4 = jax.random.split(key, 5)

    batch = 8
    input_dim = 16
    hidden_dim = 30

    x = jax.random.normal(kx, (batch, input_dim), dtype=jnp.float32)

    # Deterministic "PyTorch-like" init (uniform in +/- 1/sqrt(fan_in)).
    bound1 = 1.0 / (input_dim ** 0.5)
    w1 = jax.random.uniform(k1, (hidden_dim, input_dim), jnp.float32, -bound1, bound1)
    b1 = jax.random.uniform(k2, (hidden_dim,), jnp.float32, -bound1, bound1)

    bound2 = 1.0 / (hidden_dim ** 0.5)
    w2 = jax.random.uniform(k3, (1, hidden_dim), jnp.float32, -bound2, bound2)
    b2 = jax.random.uniform(k4, (1,), jnp.float32, -bound2, bound2)

    out = mlp_forward(x, w1, b1, w2, b2)
    jax.block_until_ready(out)

    # Reference check in plain JAX (f32).  Matmul inputs are bf16 in the
    # kernel (f32 accumulate), so the tolerance is loosened accordingly.
    ref = jax.nn.sigmoid(jnp.maximum(x @ w1.T + b1, 0.0) @ w2.T + b2)
    assert out.shape == (batch, 1)
    assert jnp.allclose(out, ref, atol=1e-2, rtol=1e-2)

    print("KERNEL_OK")
</pallas_src>

<mosaic_0001>
module attributes {stable_mosaic.version = 11 : i64} {
  func.func @mlp_kernel(%arg0: i32, %arg1: memref<16x512xbf16, #tpu.memory_space<vmem>>, %arg2: memref<32x16xbf16, #tpu.memory_space<vmem>>, %arg3: memref<32x1xf32, #tpu.memory_space<vmem>>, %arg4: memref<32x1xf32, #tpu.memory_space<vmem>>, %arg5: memref<1x1xf32, #tpu.memory_space<smem>>, %arg6: memref<1x512xf32, #tpu.memory_space<vmem>>) attributes {dimension_semantics = [#tpu.dimension_semantics<parallel>], iteration_bounds = array<i64: 1>, scalar_prefetch = 0 : i64, scratch_operands = 0 : i64, tpu.core_type = #tpu.core_type<tc>, window_params = [{transform_indices = @transform_0, window_bounds = array<i64: 16, 512>}, {pipeline_mode = #tpu.pipeline_mode<synchronous>, transform_indices = @transform_1, window_bounds = array<i64: 32, 16>}, {pipeline_mode = #tpu.pipeline_mode<synchronous>, transform_indices = @transform_2, window_bounds = array<i64: 32, 1>}, {pipeline_mode = #tpu.pipeline_mode<synchronous>, transform_indices = @transform_3, window_bounds = array<i64: 32, 1>}, {transform_indices = @transform_4, window_bounds = array<i64: 1, 1>}, {transform_indices = @transform_5, window_bounds = array<i64: 1, 512>}]} {
    %c0 = arith.constant 0 : index
    %c0_0 = arith.constant 0 : index
    %0 = vector.load %arg1[%c0, %c0_0] : memref<16x512xbf16, #tpu.memory_space<vmem>>, vector<16x512xbf16>
    %c0_1 = arith.constant 0 : index
    %c0_2 = arith.constant 0 : index
    %1 = vector.load %arg2[%c0_1, %c0_2] : memref<32x16xbf16, #tpu.memory_space<vmem>>, vector<32x16xbf16>
    %c0_3 = arith.constant 0 : index
    %c0_4 = arith.constant 0 : index
    %2 = vector.load %arg3[%c0_3, %c0_4] : memref<32x1xf32, #tpu.memory_space<vmem>>, vector<32x1xf32>
    %c0_5 = arith.constant 0 : index
    %c0_6 = arith.constant 0 : index
    %3 = vector.load %arg4[%c0_5, %c0_6] : memref<32x1xf32, #tpu.memory_space<vmem>>, vector<32x1xf32>
    %c0_7 = arith.constant 0 : index
    %c0_8 = arith.constant 0 : index
    %4 = memref.load %arg5[%c0_7, %c0_8] : memref<1x1xf32, #tpu.memory_space<smem>>
    %cst = arith.constant dense<0.000000e+00> : vector<32x512xf32>
    %5 = tpu.matmul %1, %0, %cst {dimension_numbers = #tpu.dot_dimension_numbers<[1], [0], [0], [1], [0, 0, 1, 1], [], []>} : vector<32x16xbf16>, vector<16x512xbf16>, vector<32x512xf32> -> vector<32x512xf32>
    %6 = vector.broadcast %2 : vector<32x1xf32> to vector<32x512xf32>
    %7 = arith.addf %5, %6 : vector<32x512xf32>
    %cst_9 = arith.constant 0.000000e+00 : f32
    %8 = vector.broadcast %cst_9 : f32 to vector<32x512xf32>
    %9 = arith.maximumf %7, %8 : vector<32x512xf32>
    %10 = vector.broadcast %3 : vector<32x1xf32> to vector<32x512xf32>
    %11 = arith.mulf %9, %10 : vector<32x512xf32>
    %cst_10 = arith.constant dense<0.000000e+00> : vector<512xf32>
    %12 = vector.multi_reduction <add>, %11, %cst_10 [0] : vector<32x512xf32> to vector<512xf32>
    %13 = vector.shape_cast %12 : vector<512xf32> to vector<1x512xf32>
    %14 = vector.broadcast %4 : f32 to vector<1x512xf32>
    %15 = arith.addf %13, %14 : vector<1x512xf32>
    %16 = arith.negf %15 : vector<1x512xf32>
    %17 = math.exp %16 : vector<1x512xf32>
    %cst_11 = arith.constant 1.000000e+00 : f32
    %18 = vector.broadcast %cst_11 : f32 to vector<1x512xf32>
    %19 = arith.addf %18, %17 : vector<1x512xf32>
    %20 = arith.divf %18, %19 : vector<1x512xf32>
    %c0_12 = arith.constant 0 : index
    %c0_13 = arith.constant 0 : index
    %21 = vector.load %arg6[%c0_12, %c0_13] : memref<1x512xf32, #tpu.memory_space<vmem>>, vector<1x512xf32>
    tpu.vector_store %arg6[%c0_12, %c0_13], %20 {strides = array<i32>} : memref<1x512xf32, #tpu.memory_space<vmem>>, vector<1x512xf32>,
    return
  }
  func.func @transform_0(%arg0: i32) -> (i32, i32) {
    %c0_i32 = arith.constant 0 : i32
    %c0_i32_0 = arith.constant 0 : i32
    return %c0_i32, %arg0 : i32, i32
  }
  func.func @transform_1(%arg0: i32) -> (i32, i32) {
    %c0_i32 = arith.constant 0 : i32
    %c0_i32_0 = arith.constant 0 : i32
    %c0_i32_1 = arith.constant 0 : i32
    return %c0_i32, %c0_i32_0 : i32, i32
  }
  func.func @transform_2(%arg0: i32) -> (i32, i32) {
    %c0_i32 = arith.constant 0 : i32
    %c0_i32_0 = arith.constant 0 : i32
    %c0_i32_1 = arith.constant 0 : i32
    return %c0_i32, %c0_i32_0 : i32, i32
  }
  func.func @transform_3(%arg0: i32) -> (i32, i32) {
    %c0_i32 = arith.constant 0 : i32
    %c0_i32_0 = arith.constant 0 : i32
    %c0_i32_1 = arith.constant 0 : i32
    return %c0_i32, %c0_i32_0 : i32, i32
  }
  func.func @transform_4(%arg0: i32) -> (i32, i32) {
    %c0_i32 = arith.constant 0 : i32
    %c0_i32_0 = arith.constant 0 : i32
    %c0_i32_1 = arith.constant 0 : i32
    return %c0_i32, %c0_i32_0 : i32, i32
  }
  func.func @transform_5(%arg0: i32) -> (i32, i32) {
    %c0_i32 = arith.constant 0 : i32
    %c0_i32_0 = arith.constant 0 : i32
    return %c0_i32, %arg0 : i32, i32
  }
}

</mosaic_0001>

<llo_original>
// kernel: tpu_custom_call.1
$region0: #{tpu_custom_call.1}
  #allocation0 [shape = 'u32[]', space=smem, size = 0x4, offset = 0x4, fixed_abs, tag = 'smem constant byte address 0x4 - core index']
  #allocation1 [shape = 'u32[72,128]{1,0:T(1,128)}', space=vmem, size = 0x9000, scoped, tag = 'internal scratch']
  #allocation2 [shape = 'f32[1,1]{1,0:T(1,128)S(6)}', space=smem, size = 0x200, scoped, tag = 'scoped memory for tpu_custom_call.1']
  %s0 = inlined_call_operand.vmem [shape: bf16[16,512], index: 0, kind: input, shape index: {}]
  %s1 = inlined_call_operand.vmem [shape: bf16[32,16], index: 1, kind: input, shape index: {}]
  %s2 = inlined_call_operand.vmem [shape: f32[32,1], index: 2, kind: input, shape index: {}]
  %s3 = inlined_call_operand.vmem [shape: f32[32,1], index: 3, kind: input, shape index: {}]
  %s4 = inlined_call_operand.<no memory space> [shape: f32[1,1], index: 4, kind: input, shape index: {}]
  %s5 = inlined_call_operand.hbm [shape: f32[1,512], index: 5, kind: output, shape index: {}]
  %s6 = sld [smem:[#allocation0]]
  $region30: #{tpu_custom_call.1} parent=0
    _
  %s8 = ssub.s32 1, %s6
  %s9 = scalar_select 0, %s8, %s6
  %10 = sst [smem:[#allocation2]] %s4
  $region1: #{tpu_custom_call.1} parent=0
    #allocation3 [shape = 'u8[2048]{0}', space=vmem, size = 0x800, scoped, tag = 'output window, operand 0, single buffered']
    #allocation4 [shape = 's32[1]{0}', space=sflag, size = 0x4, scoped, tag = 'scoped memory for tpu_custom_call.1']
    %11 = vsyncpa [#allocation4], 0
    // Predicated region
    $region2: #{tpu_custom_call.1} parent=1 // pred_check
      _
    $region3: #{tpu_custom_call.1} parent=1 // pred_check_branch
      %13 = sbr.rel (0) target = $region5
    $region4: #{tpu_custom_call.1} parent=1 // pred_region
      _
    $region5: #{tpu_custom_call.1} parent=1 // pred_fallthru
      _
    // Predicated region
    $region6: #{tpu_custom_call.1} parent=1 // pred_check
      _
    $region7: #{tpu_custom_call.1} parent=1 // pred_check_branch
      %15 = sbr.rel (0) target = $region9
    $region8: #{tpu_custom_call.1} parent=1 // pred_region
      _
    $region9: #{tpu_custom_call.1} parent=1 // pred_fallthru
      _
    // Predicated region
    $region10: #{tpu_custom_call.1} parent=1 // pred_check
      _
    $region11: #{tpu_custom_call.1} parent=1 // pred_check_branch
      %17 = sbr.rel (0) target = $region13
    $region12: #{tpu_custom_call.1} parent=1 // pred_region
      _
    $region13: #{tpu_custom_call.1} parent=1 // pred_fallthru
      _
    // Predicated region
    $region14: #{tpu_custom_call.1} parent=1 // pred_check
      _
    $region15: #{tpu_custom_call.1} parent=1 // pred_check_branch
      %19 = sbr.rel (0) target = $region17
    $region16: #{tpu_custom_call.1} parent=1 // pred_region
      _
    $region17: #{tpu_custom_call.1} parent=1 // pred_fallthru
      _
    // Predicated region
    $region18: #{tpu_custom_call.1} parent=1 // pred_check
      _
    $region19: #{tpu_custom_call.1} parent=1 // pred_check_branch
      %21 = sbr.rel (0) target = $region21
    $region20: #{tpu_custom_call.1} parent=1 // pred_region
      _
    $region21: #{tpu_custom_call.1} parent=1 // pred_fallthru
      _
    %v23 = vld [vmem:[%s0] sm:$0xff]
    %v24 = vld [vmem:[%s0 + $0x8] sm:$0xff]
    %v25 = vld [vmem:[%s0 + $0x10] sm:$0xff]
    %v26 = vld [vmem:[%s0 + $0x18] sm:$0xff]
    %v27 = vld [vmem:[%s1] sm:$0xf]
    %v28 = vld [vmem:[%s1 + $0x4] sm:$0xf]
    %v29 = vld [vmem:[%s1 + $0x8] sm:$0xf]
    %v30 = vld [vmem:[%s1 + $0xc] sm:$0xf]
    %v31 = vld [vmem:[%s2] sm:$0xff]
    %v32 = vld [vmem:[%s2 + $0x8] sm:$0xff]
    %v33 = vld [vmem:[%s2 + $0x10] sm:$0xff]
    %v34 = vld [vmem:[%s2 + $0x18] sm:$0xff]
    %v35 = vld [vmem:[%s3] sm:$0xff]
    %v36 = vld [vmem:[%s3 + $0x8] sm:$0xff]
    %v37 = vld [vmem:[%s3 + $0x10] sm:$0xff]
    %v38 = vld [vmem:[%s3 + $0x18] sm:$0xff]
    %s39 = sld [smem:[#allocation2]]
    %41 = vset.pattern.permute.xlu0 0
    %42 = vperm.xlu0 %41, %v31
    %v43 = vpop.permute.xlu0 %42
    %46 = vset.pattern.permute.xlu0 0
    %47 = vperm.xlu0 %46, %v32
    %v48 = vpop.permute.xlu0 %47
    %51 = vset.pattern.permute.xlu0 0
    %52 = vperm.xlu0 %51, %v33
    %v53 = vpop.permute.xlu0 %52
    %56 = vset.pattern.permute.xlu0 0
    %57 = vperm.xlu0 %56, %v34
    %v58 = vpop.permute.xlu0 %57
    %v64 = vunpack.c.l.b16 %v27
    %v65 = vunpack.c.l.b16 %v28
    %v66 = vunpack.c.l.b16 %v29
    %v67 = vunpack.c.l.b16 %v30
    %v68 = vpack.c.b16 %v65, %v64
    %v69 = vpack.c.b16 %v67, %v66
    %v74 = vunpack.c.l.b16 %v23
    %v75 = vunpack.c.h.b16 %v23
    %v76 = vunpack.c.l.b16 %v24
    %v77 = vunpack.c.h.b16 %v24
    %v78 = vunpack.c.l.b16 %v25
    %v79 = vunpack.c.h.b16 %v25
    %v80 = vunpack.c.l.b16 %v26
    %v81 = vunpack.c.h.b16 %v26
    %v82 = vpack.c.b16 %v78, %v74
    %v83 = vpack.c.b16 %v79, %v75
    %v84 = vpack.c.b16 %v80, %v76
    %v85 = vpack.c.b16 %v81, %v77
    %vm90 = vcmask 130048
    %v92 = vsel %vm90, %v68, 0
    %v95 = vsel %vm90, %v69, 0
    %97 = vmatpush.bf16.msra.mxu0 0
    %98 = vmatpush.bf16.msra.mxu0 0
    %99 = vmatpush.bf16.msra.mxu0 0
    %100 = vmatpush.bf16.msra.mxu0 0
    %101 = vmatpush.bf16.msra.mxu0 0
    %102 = vmatpush.bf16.msra.mxu0 0
    %103 = vmatpush.bf16.msra.mxu0 0
    %104 = vmatpush.bf16.msra.mxu0 %v82
    %105 = vmatmul.bf16.gmra.mxu0 %v92
    %v106 = vpop.f32.mrf.mxu0
    %v107 = vadd.f32 %v43, %v106
    %v108 = vpop.f32.mrf.mxu0
    %v109 = vadd.f32 %v48, %v108
    %110 = vmatmul.bf16.gmra.mxu0 %v95
    %v111 = vpop.f32.mrf.mxu0
    %v112 = vadd.f32 %v53, %v111
    %v113 = vpop.f32.mrf.mxu0
    %v114 = vadd.f32 %v58, %v113
    %115 = vdwg.mxu0
    %116 = vmatpush.bf16.msra.mxu0 0
    %117 = vmatpush.bf16.msra.mxu0 0
    %118 = vmatpush.bf16.msra.mxu0 0
    %119 = vmatpush.bf16.msra.mxu0 0
    %120 = vmatpush.bf16.msra.mxu0 0
    %121 = vmatpush.bf16.msra.mxu0 0
    %122 = vmatpush.bf16.msra.mxu0 0
    %123 = vmatpush.bf16.msra.mxu0 %v83
    %124 = vmatmul.bf16.gmra.mxu0 %v92
    %v125 = vpop.f32.mrf.mxu0
    %v126 = vadd.f32 %v43, %v125
    %v127 = vpop.f32.mrf.mxu0
    %v128 = vadd.f32 %v48, %v127
    %129 = vmatmul.bf16.gmra.mxu0 %v95
    %v130 = vpop.f32.mrf.mxu0
    %v131 = vadd.f32 %v53, %v130
    %v132 = vpop.f32.mrf.mxu0
    %v133 = vadd.f32 %v58, %v132
    %134 = vdwg.mxu0
    %135 = vmatpush.bf16.msra.mxu0 0
    %136 = vmatpush.bf16.msra.mxu0 0
    %137 = vmatpush.bf16.msra.mxu0 0
    %138 = vmatpush.bf16.msra.mxu0 0
    %139 = vmatpush.bf16.msra.mxu0 0
    %140 = vmatpush.bf16.msra.mxu0 0
    %141 = vmatpush.bf16.msra.mxu0 0
    %142 = vmatpush.bf16.msra.mxu0 %v84
    %143 = vmatmul.bf16.gmra.mxu0 %v92
    %v144 = vpop.f32.mrf.mxu0
    %v145 = vadd.f32 %v43, %v144
    %v146 = vpop.f32.mrf.mxu0
    %v147 = vadd.f32 %v48, %v146
    %148 = vmatmul.bf16.gmra.mxu0 %v95
    %v149 = vpop.f32.mrf.mxu0
    %v150 = vadd.f32 %v53, %v149
    %v151 = vpop.f32.mrf.mxu0
    %v152 = vadd.f32 %v58, %v151
    %153 = vdwg.mxu0
    %154 = vmatpush.bf16.msra.mxu0 0
    %155 = vmatpush.bf16.msra.mxu0 0
    %156 = vmatpush.bf16.msra.mxu0 0
    %157 = vmatpush.bf16.msra.mxu0 0
    %158 = vmatpush.bf16.msra.mxu0 0
    %159 = vmatpush.bf16.msra.mxu0 0
    %160 = vmatpush.bf16.msra.mxu0 0
    %161 = vmatpush.bf16.msra.mxu0 %v85
    %162 = vmatmul.bf16.gmra.mxu0 %v92
    %v163 = vpop.f32.mrf.mxu0
    %v164 = vadd.f32 %v43, %v163
    %v165 = vpop.f32.mrf.mxu0
    %v166 = vadd.f32 %v48, %v165
    %167 = vmatmul.bf16.gmra.mxu0 %v95
    %v168 = vpop.f32.mrf.mxu0
    %v169 = vadd.f32 %v53, %v168
    %v170 = vpop.f32.mrf.mxu0
    %v171 = vadd.f32 %v58, %v170
    %172 = vdwg.mxu0
    %v173 = vmax.f32 %v107, 0.0
    %v174 = vmax.f32 %v126, 0.0
    %v175 = vmax.f32 %v145, 0.0
    %v176 = vmax.f32 %v164, 0.0
    %v177 = vmax.f32 %v109, 0.0
    %v178 = vmax.f32 %v128, 0.0
    %v179 = vmax.f32 %v147, 0.0
    %v180 = vmax.f32 %v166, 0.0
    %v181 = vmax.f32 %v112, 0.0
    %v182 = vmax.f32 %v131, 0.0
    %v183 = vmax.f32 %v150, 0.0
    %v184 = vmax.f32 %v169, 0.0
    %v185 = vmax.f32 %v114, 0.0
    %v186 = vmax.f32 %v133, 0.0
    %v187 = vmax.f32 %v152, 0.0
    %v188 = vmax.f32 %v171, 0.0
    %190 = vset.pattern.permute.xlu0 0
    %191 = vperm.xlu0 %190, %v35
    %v192 = vpop.permute.xlu0 %191
    %195 = vset.pattern.permute.xlu0 0
    %196 = vperm.xlu0 %195, %v36
    %v197 = vpop.permute.xlu0 %196
    %200 = vset.pattern.permute.xlu0 0
    %201 = vperm.xlu0 %200, %v37
    %v202 = vpop.permute.xlu0 %201
    %205 = vset.pattern.permute.xlu0 0
    %206 = vperm.xlu0 %205, %v38
    %v207 = vpop.permute.xlu0 %206
    %v209 = vmul.f32 %v173, %v192
    %v210 = vmul.f32 %v174, %v192
    %v211 = vmul.f32 %v175, %v192
    %v212 = vmul.f32 %v176, %v192
    %v213 = vmul.f32 %v177, %v197
    %v214 = vmul.f32 %v178, %v197
    %v215 = vmul.f32 %v179, %v197
    %v216 = vmul.f32 %v180, %v197
    %v217 = vmul.f32 %v181, %v202
    %v218 = vmul.f32 %v182, %v202
    %v219 = vmul.f32 %v183, %v202
    %v220 = vmul.f32 %v184, %v202
    %v221 = vmul.f32 %v185, %v207
    %v222 = vmul.f32 %v186, %v207
    %v223 = vmul.f32 %v187, %v207
    %v224 = vmul.f32 %v188, %v207
    %v225 = vadd.f32 %v209, %v213
    %v226 = vadd.f32 %v225, %v217
    %v227 = vadd.f32 %v226, %v221
    %v228 = vrot.slane %v227, 4
    %v229 = vadd.f32 %v227, %v228
    %v230 = vrot.slane %v229, 2
    %v231 = vadd.f32 %v229, %v230
    %v232 = vrot.slane %v231, 1
    %v233 = vadd.f32 %v231, %v232
    %v234 = vadd.f32 %v210, %v214
    %v235 = vadd.f32 %v234, %v218
    %v236 = vadd.f32 %v235, %v222
    %v237 = vrot.slane %v236, 4
    %v238 = vadd.f32 %v236, %v237
    %v239 = vrot.slane %v238, 2
    %v240 = vadd.f32 %v238, %v239
    %v241 = vrot.slane %v240, 1
    %v242 = vadd.f32 %v240, %v241
    %v243 = vadd.f32 %v211, %v215
    %v244 = vadd.f32 %v243, %v219
    %v245 = vadd.f32 %v244, %v223
    %v246 = vrot.slane %v245, 4
    %v247 = vadd.f32 %v245, %v246
    %v248 = vrot.slane %v247, 2
    %v249 = vadd.f32 %v247, %v248
    %v250 = vrot.slane %v249, 1
    %v251 = vadd.f32 %v249, %v250
    %v252 = vadd.f32 %v212, %v216
    %v253 = vadd.f32 %v252, %v220
    %v254 = vadd.f32 %v253, %v224
    %v255 = vrot.slane %v254, 4
    %v256 = vadd.f32 %v254, %v255
    %v257 = vrot.slane %v256, 2
    %v258 = vadd.f32 %v256, %v257
    %v259 = vrot.slane %v258, 1
    %v260 = vadd.f32 %v258, %v259
    %v261 = vstv %s39
    %v262 = vadd.f32 %v233, %v261
    %v263 = vadd.f32 %v242, %v261
    %v264 = vadd.f32 %v251, %v261
    %v265 = vadd.f32 %v260, %v261
    %v266 = vxor.u32 %v262, 2147483648
    %v267 = vxor.u32 %v263, 2147483648
    %v268 = vxor.u32 %v264, 2147483648
    %v269 = vxor.u32 %v265, 2147483648
    %v270 = vmul.f32 %v266, 1.442695
    %v271 = vpow.pop %v270
    %v272 = vmul.f32 %v267, 1.442695
    %v273 = vpow.pop %v272
    %v274 = vmul.f32 %v268, 1.442695
    %v275 = vpow.pop %v274
    %v276 = vmul.f32 %v269, 1.442695
    %v277 = vpow.pop %v276
    %v278 = vadd.f32 %v271, 1.0
    %v279 = vadd.f32 %v273, 1.0
    %v280 = vadd.f32 %v275, 1.0
    %v281 = vadd.f32 %v277, 1.0
    %v282 = vrcp.pop %v278
    %v283 = vmul.f32 %v278, %v282
    %v284 = vsub.f32 1.0, %v283
    %v285 = vmul.f32 %v282, %v284
    %v286 = vadd.f32 %v282, %v285
    %vm287 = vweird.f32 %v278
    %vm288 = vweird.f32 %v282
    %vm289 = vmor %vm287, %vm288
    %v290 = vsel %vm289, %v282, %v286
    %v291 = vand.u32 2147483647, %v278
    %vm292 = vcmp.eq.f32.partialorder %v291, 8.507059e+37
    %v293 = vand.u32 %v278, 2147483648
    %v294 = vor.u32 1.1754944e-38, %v293
    %v295 = vsel %vm292, %v294, %v290
    %v296 = vmul.f32 1.0, %v295
    %v297 = vrcp.pop %v279
    %v298 = vmul.f32 %v279, %v297
    %v299 = vsub.f32 1.0, %v298
    %v300 = vmul.f32 %v297, %v299
    %v301 = vadd.f32 %v297, %v300
    %vm302 = vweird.f32 %v279
    %vm303 = vweird.f32 %v297
    %vm304 = vmor %vm302, %vm303
    %v305 = vsel %vm304, %v297, %v301
    %v306 = vand.u32 2147483647, %v279
    %vm307 = vcmp.eq.f32.partialorder %v306, 8.507059e+37
    %v308 = vand.u32 %v279, 2147483648
    %v309 = vor.u32 1.1754944e-38, %v308
    %v310 = vsel %vm307, %v309, %v305
    %v311 = vmul.f32 1.0, %v310
    %v312 = vrcp.pop %v280
    %v313 = vmul.f32 %v280, %v312
    %v314 = vsub.f32 1.0, %v313
    %v315 = vmul.f32 %v312, %v314
    %v316 = vadd.f32 %v312, %v315
    %vm317 = vweird.f32 %v280
    %vm318 = vweird.f32 %v312
    %vm319 = vmor %vm317, %vm318
    %v320 = vsel %vm319, %v312, %v316
    %v321 = vand.u32 2147483647, %v280
    %vm322 = vcmp.eq.f32.partialorder %v321, 8.507059e+37
    %v323 = vand.u32 %v280, 2147483648
    %v324 = vor.u32 1.1754944e-38, %v323
    %v325 = vsel %vm322, %v324, %v320
    %v326 = vmul.f32 1.0, %v325
    %v327 = vrcp.pop %v281
    %v328 = vmul.f32 %v281, %v327
    %v329 = vsub.f32 1.0, %v328
    %v330 = vmul.f32 %v327, %v329
    %v331 = vadd.f32 %v327, %v330
    %vm332 = vweird.f32 %v281
    %vm333 = vweird.f32 %v327
    %vm334 = vmor %vm332, %vm333
    %v335 = vsel %vm334, %v327, %v331
    %v336 = vand.u32 2147483647, %v281
    %vm337 = vcmp.eq.f32.partialorder %v336, 8.507059e+37
    %v338 = vand.u32 %v281, 2147483648
    %v339 = vor.u32 1.1754944e-38, %v338
    %v340 = vsel %vm337, %v339, %v335
    %v341 = vmul.f32 1.0, %v340
    %v346 = vrot.slane %v311, 7
    %v347 = vrot.slane %v326, 6
    %v348 = vrot.slane %v341, 5
    %vm349 = vcmask 1040384
    %v350 = vsel %vm349, %v296, %v346
    %vm351 = vcmask 1042434
    %v352 = vsel %vm351, %v347, %v348
    %vm353 = vcmask 1041408
    %v354 = vsel %vm353, %v350, %v352
    %v356 = vlaneseq
    %vm357 = vcmp.ge.s32.totalorder %v356, 0
    %vm358 = vcmp.lt.s32.totalorder %v356, 512
    %vm359 = vmand %vm357, %vm358
    %360 = vst.msk [vmem:[#allocation3] sm:$0xf] %vm359, %v354
    // Predicated region
    $region22: #{tpu_custom_call.1} parent=1 // pred_check
      _
    $region23: #{tpu_custom_call.1} parent=1 // pred_check_branch
      %362 = sbr.rel (0) target = $region25
    $region24: #{tpu_custom_call.1} parent=1 // pred_region
      %364 = vsyncadd [#allocation4], 0
      %s366 = sshll.u32 [#allocation3], 4
      %s367 = int_to_ptr.vmem [resolvable:$true] %s366
      %s368 = sshll.u32 %s5, 4
      %s369 = int_to_ptr.hbm [resolvable:$true] %s368
      %371 = dma.vmem_to_hbm [thread:$0]  %s367, 64, %s369, [#allocation4]
    $region25: #{tpu_custom_call.1} parent=1 // pred_fallthru
      _
    // Predicated region
    $region26: #{tpu_custom_call.1} parent=1 // pred_check
      _
    $region27: #{tpu_custom_call.1} parent=1 // pred_check_branch
      %373 = sbr.rel (0) target = $region29
    $region28: #{tpu_custom_call.1} parent=1 // pred_region
      %375 = dma.done [#allocation4], 64
    $region29: #{tpu_custom_call.1} parent=1 // pred_fallthru
      _
    %376 = vsyncpa [#allocation4], 1

</llo_original>
